<compile_context>
chip_gen: v7x
topology: tpu7x:2x2x1
jax: 0.10.0
libtpu: 0.0.40
codegen_flags: <defaults>
</compile_context>

<pallas_src>
import functools

import numpy as np
import jax
import jax.numpy as jnp
from jax.experimental import pallas as pl
from jax.experimental.pallas import tpu as pltpu

LEAK = 0.2   # LeakyReLU negative slope
CPAD = 16    # channel padding = bf16 sublane packing (16 rows / packed vreg)


def _leaky(v):
    return jnp.where(v > 0, v, LEAK * v)


def _round_up(x, m):
    return (x + m - 1) // m * m


def _residual_block_kernel(x_ref, mask_ref, w1_ref, b1_ref, w2_ref, b2_ref,
                           out_ref, *, K, WP2, LPACK, LPACK_OUT, COUT_P, has_proj):
    # x_ref:   (1, CIN_P, B_TILE*LX)   bf16  packed, padded input for one grid step
    # mask_ref:(1, LPACK)              f32   1.0 on conv2's valid (non zero-pad) lanes
    # w1_ref:  (W1_ROWS, K*K*CIN_P)    bf16  conv1 (+ fused 1x1 projection) im2col weights
    # b1_ref:  (W1_ROWS, 1)            f32   conv1 bias (+ projection bias rows)
    # w2_ref:  (COUT_P, K*K*COUT_P)    bf16  conv2 im2col weights
    # b2_ref:  (COUT_P, 1)             f32
    # out_ref: (1, COUT_P, LPACK_OUT)  f32   NCHW-flattened, lane-packed output
    p = K // 2
    x = x_ref[0]                                           # bf16, no f32 round trip

    # ---- conv1 (+ fused projection): bf16 im2col -> ONE MXU push, f32 accumulation.
    xcat = jnp.concatenate(
        [x[:, dh * WP2 + dw: dh * WP2 + dw + LPACK]
         for dh in range(K) for dw in range(K)], axis=0)   # (K*K*CIN_P, LPACK) bf16
    acc1 = jnp.dot(w1_ref[...], xcat,
                   preferred_element_type=jnp.float32) + b1_ref[...]

    # conv1 activation: leaky-ReLU, zero the padding ring, single cast to bf16.
    y1 = (_leaky(acc1[:COUT_P]) * mask_ref[...]).astype(jnp.bfloat16)   # (COUT_P, LPACK)

    # ---- conv2: same bf16 im2col trick on the H x W grid.
    ycat = jnp.concatenate(
        [y1[:, dh * WP2 + dw: dh * WP2 + dw + LPACK_OUT]
         for dh in range(K) for dw in range(K)], axis=0)   # (K*K*COUT_P, LPACK_OUT) bf16
    acc2 = jnp.dot(w2_ref[...], ycat,
                   preferred_element_type=jnp.float32) + b2_ref[...]
    y2 = _leaky(acc2)                                      # (COUT_P, LPACK_OUT) f32

    # ---- residual branch
    if has_proj:
        # fused projection rows (bias already added); re-centre by p*(WP2+1) lanes.
        start = p * WP2 + p
        ident = acc1[COUT_P:, start: start + LPACK_OUT]
    else:
        # TODO(synk): identity is the bf16-rounded input; feed an f32 identity slab
        #   if tighter parity with the f32 reference is required.
        start = 2 * p * WP2 + 2 * p
        ident = x[:COUT_P, start: start + LPACK_OUT].astype(jnp.float32)

    out_ref[0] = (y2 + ident).astype(out_ref.dtype)


def residual_block_forward(x_nchw, params, kernel_size=3, batch_tile=None):
    """Pallas forward pass. x_nchw: (N, Cin, H, W) float32 -> (N, Cout, H, W) float32."""
    K = kernel_size
    p = K // 2
    N, Cin, H, W = x_nchw.shape
    w1, b1, w2, b2, wp, bp = (params["w1"], params["b1"], params["w2"],
                              params["b2"], params["wp"], params["bp"])
    Cout = w1.shape[0]
    has_proj = wp is not None
    if not has_proj:
        assert Cin == Cout, "projection is only dropped when inplanes == planes"

    CIN_P = _round_up(Cin, CPAD)
    COUT_P = _round_up(Cout, CPAD)

    # Batch packing: B_TILE samples share one grid step along the lane axis.
    # Default keeps >=2 grid steps when N >= 2 (v7x has two TensorCores).
    if batch_tile is None:
        batch_tile = min(8, max(1, N // 2))
    B_TILE = max(1, int(batch_tile))
    N_pad = _round_up(N, B_TILE)
    G = N_pad // B_TILE

    HP2, WP2 = H + 4 * p, W + 4 * p
    LOUT = H * WP2                                 # conv2 output lanes per sample (incl. wrap cols)
    LEXT = LOUT + (K - 1) * (WP2 + 1)              # conv1 extended-grid lanes per sample
    LX = LEXT + (K - 1) * (WP2 + 1)                # per-sample lane stride (input length)
    LPACK = (B_TILE - 1) * LX + LEXT               # packed conv1-output width
    LPACK_OUT = (B_TILE - 1) * LX + LOUT           # packed conv2-output width

    # NCHW stays NCHW: pad batch / channels / spatial, flatten spatial, then pack
    # B_TILE samples per grid step along lanes at stride LX.
    x = jnp.pad(x_nchw.astype(jnp.float32),
                ((0, N_pad - N), (0, CIN_P - Cin), (2 * p, 2 * p), (2 * p, 2 * p)))
    xflat = jnp.pad(x.reshape(N_pad, CIN_P, HP2 * WP2),
                    ((0, 0), (0, 0), (0, LX - HP2 * WP2)))
    xpacked = (xflat.reshape(G, B_TILE, CIN_P, LX)
               .transpose(0, 2, 1, 3)
               .reshape(G, CIN_P, B_TILE * LX)
               .astype(jnp.bfloat16))

    # Lane-dense mask (1.0 where the extended-grid lane is a real conv2 input),
    # replicated per packed sample at stride LX.
    idx = np.arange(LEXT)
    r, c = idx // WP2, idx % WP2
    m1 = ((r >= p) & (r < H + p) & (c >= p) & (c < W + p)).astype(np.float32)
    mask_np = np.zeros(LPACK, np.float32)
    for s in range(B_TILE):
        mask_np[s * LX: s * LX + LEXT] = m1
    mask = jnp.asarray(mask_np[None, :])

    # conv1 weights im2col-packed (tap-major, channel-minor); 1x1 projection fused as
    # COUT_P extra output rows with only the centre tap populated.
    w1p = jnp.pad(w1, ((0, COUT_P - Cout), (0, CIN_P - Cin), (0, 0), (0, 0)))
    w1cat = jnp.transpose(w1p, (0, 2, 3, 1)).reshape(COUT_P, K * K * CIN_P)
    b1f = jnp.pad(b1, (0, COUT_P - Cout))
    if has_proj:
        wp_full = jnp.zeros((COUT_P, CIN_P, K, K), jnp.float32)
        wp_full = wp_full.at[:Cout, :Cin, p, p].set(wp[:, :, 0, 0])
        wpcat = jnp.transpose(wp_full, (0, 2, 3, 1)).reshape(COUT_P, K * K * CIN_P)
        w1aug = jnp.concatenate([w1cat, wpcat], axis=0)              # (2*COUT_P, K*K*CIN_P)
        b1aug = jnp.concatenate([b1f, jnp.pad(bp, (0, COUT_P - Cout))])
    else:
        w1aug, b1aug = w1cat, b1f
    W1_ROWS = w1aug.shape[0]
    w1aug = w1aug.astype(jnp.bfloat16)
    b1aug = b1aug.reshape(W1_ROWS, 1).astype(jnp.float32)

    w2p = jnp.pad(w2, ((0, COUT_P - Cout), (0, COUT_P - Cout), (0, 0), (0, 0)))
    w2cat = jnp.transpose(w2p, (0, 2, 3, 1)).reshape(
        COUT_P, K * K * COUT_P).astype(jnp.bfloat16)
    b2f = jnp.pad(b2, (0, COUT_P - Cout)).reshape(COUT_P, 1).astype(jnp.float32)

    kern = functools.partial(_residual_block_kernel, K=K, WP2=WP2, LPACK=LPACK,
                             LPACK_OUT=LPACK_OUT, COUT_P=COUT_P, has_proj=has_proj)

    out = pl.pallas_call(
        kern,
        out_shape=jax.ShapeDtypeStruct((G, COUT_P, LPACK_OUT), jnp.float32),
        grid=(G,),
        in_specs=[
            pl.BlockSpec((1, CIN_P, B_TILE * LX), lambda g: (g, 0, 0)),
            # constant index_maps -> fetched once, revisited across grid steps
            pl.BlockSpec((1, LPACK), lambda g: (0, 0)),
            pl.BlockSpec((W1_ROWS, K * K * CIN_P), lambda g: (0, 0)),
            pl.BlockSpec((W1_ROWS, 1), lambda g: (0, 0)),
            pl.BlockSpec((COUT_P, K * K * COUT_P), lambda g: (0, 0)),
            pl.BlockSpec((COUT_P, 1), lambda g: (0, 0)),
        ],
        out_specs=pl.BlockSpec((1, COUT_P, LPACK_OUT), lambda g: (g, 0, 0)),
        compiler_params=pltpu.CompilerParams(dimension_semantics=("parallel",)),
    )(xpacked, mask, w1aug, b1aug, w2cat, b2f)

    # Unpack: drop padded samples / channels, wrap columns and cross-sample garbage.
    out = jnp.pad(out, ((0, 0), (0, 0), (0, B_TILE * LX - LPACK_OUT)))
    out = (out.reshape(G, COUT_P, B_TILE, LX)
           .transpose(0, 2, 1, 3)
           .reshape(N_pad, COUT_P, LX))
    out = out[:N, :Cout, :LOUT].reshape(N, Cout, H, WP2)[:, :, :, :W]
    return out


def _ref_forward(x, w1, b1, w2, b2, wp, bp):
    """Pure-JAX (XLA conv, f32) reference of the PyTorch module, NCHW."""
    dn = ("NCHW", "OIHW", "NCHW")
    y = jax.lax.conv_general_dilated(x, w1, (1, 1), "SAME", dimension_numbers=dn)
    y = _leaky(y + b1[None, :, None, None])
    y = jax.lax.conv_general_dilated(y, w2, (1, 1), "SAME", dimension_numbers=dn)
    y = _leaky(y + b2[None, :, None, None])
    ident = x
    if wp is not None:
        ident = jax.lax.conv_general_dilated(x, wp, (1, 1), "SAME",
                                             dimension_numbers=dn)
        ident = ident + bp[None, :, None, None]
    return y + ident


if __name__ == "__main__":
    K = 3
    key = jax.random.PRNGKey(0)

    def uinit(k, shape, fan_in):          # deterministic, PyTorch-like uniform init
        bound = 1.0 / np.sqrt(fan_in)
        return jax.random.uniform(k, shape, jnp.float32, -bound, bound)

    def make_params(k, Cin, Cout, with_proj):
        ks = jax.random.split(k, 6)
        return dict(
            w1=uinit(ks[0], (Cout, Cin, K, K), Cin * K * K),
            b1=uinit(ks[1], (Cout,), Cin * K * K),
            w2=uinit(ks[2], (Cout, Cout, K, K), Cout * K * K),
            b2=uinit(ks[3], (Cout,), Cout * K * K),
            wp=uinit(ks[4], (Cout, Cin, 1, 1), Cin) if with_proj else None,
            bp=uinit(ks[5], (Cout,), Cin) if with_proj else None,
        )

    def check(name, k, N, Cin, Cout, H, W, batch_tile):
        kp, kx = jax.random.split(k)
        params = make_params(kp, Cin, Cout, Cin != Cout)
        x = jax.random.normal(kx, (N, Cin, H, W), jnp.float32)
        out = jax.block_until_ready(
            residual_block_forward(x, params, kernel_size=K, batch_tile=batch_tile))
        ref = _ref_forward(x, params["w1"], params["b1"], params["w2"],
                           params["b2"], params["wp"], params["bp"])
        assert out.shape == (N, Cout, H, W), (name, out.shape)
        err = float(np.max(np.abs(np.asarray(out) - np.asarray(ref))))
        # Tolerance sized for bf16 MXU operands with f32 accumulation (err ~1e-2).
        assert np.allclose(np.asarray(out), np.asarray(ref),
                           atol=5e-2, rtol=5e-2), (name, err)

    keys = jax.random.split(key, 3)
    # primary shapes: proj path, default batch_tile -> 2 parallel grid steps
    check("proj_unpacked", keys[0], 2, 4, 8, 16, 16, None)
    # proj path with batch packing (2 samples per lane-packed grid step, 2 steps)
    check("proj_packed", keys[1], 4, 4, 8, 16, 16, None)
    # identity (no projection) path with batch packing, single grid step
    check("noproj_packed", keys[2], 2, 8, 8, 16, 16, 2)
    print("KERNEL_OK")
</pallas_src>

<mosaic_0001>
module attributes {stable_mosaic.version = 11 : i64} {
  func.func @_residual_block_kernel(%arg0: i32, %arg1: memref<1x16x404xbf16, #tpu.memory_space<vmem>>, %arg2: memref<1x362xf32, #tpu.memory_space<vmem>>, %arg3: memref<32x144xbf16, #tpu.memory_space<vmem>>, %arg4: memref<32x1xf32, #tpu.memory_space<vmem>>, %arg5: memref<16x144xbf16, #tpu.memory_space<vmem>>, %arg6: memref<16x1xf32, #tpu.memory_space<vmem>>, %arg7: memref<1x16x320xf32, #tpu.memory_space<vmem>>) attributes {dimension_semantics = [#tpu.dimension_semantics<parallel>], iteration_bounds = array<i64: 2>, scalar_prefetch = 0 : i64, scratch_operands = 0 : i64, tpu.core_type = #tpu.core_type<tc>, window_params = [{transform_indices = @transform_0, window_bounds = array<i64: 1, 16, 404>}, {pipeline_mode = #tpu.pipeline_mode<synchronous>, transform_indices = @transform_1, window_bounds = array<i64: 1, 362>}, {pipeline_mode = #tpu.pipeline_mode<synchronous>, transform_indices = @transform_2, window_bounds = array<i64: 32, 144>}, {pipeline_mode = #tpu.pipeline_mode<synchronous>, transform_indices = @transform_3, window_bounds = array<i64: 32, 1>}, {pipeline_mode = #tpu.pipeline_mode<synchronous>, transform_indices = @transform_4, window_bounds = array<i64: 16, 144>}, {pipeline_mode = #tpu.pipeline_mode<synchronous>, transform_indices = @transform_5, window_bounds = array<i64: 16, 1>}, {transform_indices = @transform_6, window_bounds = array<i64: 1, 16, 320>}]} {
    %c0 = arith.constant 0 : index
    %c0_0 = arith.constant 0 : index
    %c0_1 = arith.constant 0 : index
    %0 = vector.load %arg1[%c0, %c0_0, %c0_1] : memref<1x16x404xbf16, #tpu.memory_space<vmem>>, vector<1x16x404xbf16>
    %1 = vector.shape_cast %0 : vector<1x16x404xbf16> to vector<16x404xbf16>
    %2 = vector.extract_strided_slice %1 {offsets = [0, 0], sizes = [16, 362], strides = [1, 1]} : vector<16x404xbf16> to vector<16x362xbf16>
    %3 = vector.extract_strided_slice %1 {offsets = [0, 1], sizes = [16, 362], strides = [1, 1]} : vector<16x404xbf16> to vector<16x362xbf16>
    %4 = vector.extract_strided_slice %1 {offsets = [0, 2], sizes = [16, 362], strides = [1, 1]} : vector<16x404xbf16> to vector<16x362xbf16>
    %5 = vector.extract_strided_slice %1 {offsets = [0, 20], sizes = [16, 362], strides = [1, 1]} : vector<16x404xbf16> to vector<16x362xbf16>
    %6 = vector.extract_strided_slice %1 {offsets = [0, 21], sizes = [16, 362], strides = [1, 1]} : vector<16x404xbf16> to vector<16x362xbf16>
    %7 = vector.extract_strided_slice %1 {offsets = [0, 22], sizes = [16, 362], strides = [1, 1]} : vector<16x404xbf16> to vector<16x362xbf16>
    %8 = vector.extract_strided_slice %1 {offsets = [0, 40], sizes = [16, 362], strides = [1, 1]} : vector<16x404xbf16> to vector<16x362xbf16>
    %9 = vector.extract_strided_slice %1 {offsets = [0, 41], sizes = [16, 362], strides = [1, 1]} : vector<16x404xbf16> to vector<16x362xbf16>
    %10 = vector.extract_strided_slice %1 {offsets = [0, 42], sizes = [16, 362], strides = [1, 1]} : vector<16x404xbf16> to vector<16x362xbf16>
    %11 = tpu.concatenate %2, %3, %4, %5, %6, %7, %8, %9, %10 in 0 : vector<16x362xbf16>, vector<16x362xbf16>, vector<16x362xbf16>, vector<16x362xbf16>, vector<16x362xbf16>, vector<16x362xbf16>, vector<16x362xbf16>, vector<16x362xbf16>, vector<16x362xbf16> -> vector<144x362xbf16>
    %c0_2 = arith.constant 0 : index
    %c0_3 = arith.constant 0 : index
    %12 = vector.load %arg3[%c0_2, %c0_3] : memref<32x144xbf16, #tpu.memory_space<vmem>>, vector<32x144xbf16>
    %cst = arith.constant dense<0.000000e+00> : vector<32x362xf32>
    %13 = tpu.matmul %12, %11, %cst {dimension_numbers = #tpu.dot_dimension_numbers<[1], [0], [0], [1], [0, 0, 1, 1], [], []>} : vector<32x144xbf16>, vector<144x362xbf16>, vector<32x362xf32> -> vector<32x362xf32>
    %c0_4 = arith.constant 0 : index
    %c0_5 = arith.constant 0 : index
    %14 = vector.load %arg4[%c0_4, %c0_5] : memref<32x1xf32, #tpu.memory_space<vmem>>, vector<32x1xf32>
    %15 = vector.broadcast %14 : vector<32x1xf32> to vector<32x362xf32>
    %16 = arith.addf %13, %15 : vector<32x362xf32>
    %17 = vector.extract_strided_slice %16 {offsets = [0, 0], sizes = [16, 362], strides = [1, 1]} : vector<32x362xf32> to vector<16x362xf32>
    %cst_6 = arith.constant 0.000000e+00 : f32
    %18 = vector.broadcast %cst_6 : f32 to vector<16x362xf32>
    %19 = arith.cmpf ogt, %17, %18 : vector<16x362xf32>
    %cst_7 = arith.constant 2.000000e-01 : f32
    %20 = vector.broadcast %cst_7 : f32 to vector<16x362xf32>
    %21 = arith.mulf %20, %17 : vector<16x362xf32>
    %22 = arith.select %19, %17, %21 : vector<16x362xi1>, vector<16x362xf32>
    %c0_8 = arith.constant 0 : index
    %c0_9 = arith.constant 0 : index
    %23 = vector.load %arg2[%c0_8, %c0_9] : memref<1x362xf32, #tpu.memory_space<vmem>>, vector<1x362xf32>
    %24 = vector.broadcast %23 : vector<1x362xf32> to vector<16x362xf32>
    %25 = arith.mulf %22, %24 : vector<16x362xf32>
    %26 = arith.truncf %25 : vector<16x362xf32> to vector<16x362xbf16>
    %27 = vector.extract_strided_slice %26 {offsets = [0, 0], sizes = [16, 320], strides = [1, 1]} : vector<16x362xbf16> to vector<16x320xbf16>
    %28 = vector.extract_strided_slice %26 {offsets = [0, 1], sizes = [16, 320], strides = [1, 1]} : vector<16x362xbf16> to vector<16x320xbf16>
    %29 = vector.extract_strided_slice %26 {offsets = [0, 2], sizes = [16, 320], strides = [1, 1]} : vector<16x362xbf16> to vector<16x320xbf16>
    %30 = vector.extract_strided_slice %26 {offsets = [0, 20], sizes = [16, 320], strides = [1, 1]} : vector<16x362xbf16> to vector<16x320xbf16>
    %31 = vector.extract_strided_slice %26 {offsets = [0, 21], sizes = [16, 320], strides = [1, 1]} : vector<16x362xbf16> to vector<16x320xbf16>
    %32 = vector.extract_strided_slice %26 {offsets = [0, 22], sizes = [16, 320], strides = [1, 1]} : vector<16x362xbf16> to vector<16x320xbf16>
    %33 = vector.extract_strided_slice %26 {offsets = [0, 40], sizes = [16, 320], strides = [1, 1]} : vector<16x362xbf16> to vector<16x320xbf16>
    %34 = vector.extract_strided_slice %26 {offsets = [0, 41], sizes = [16, 320], strides = [1, 1]} : vector<16x362xbf16> to vector<16x320xbf16>
    %35 = vector.extract_strided_slice %26 {offsets = [0, 42], sizes = [16, 320], strides = [1, 1]} : vector<16x362xbf16> to vector<16x320xbf16>
    %36 = tpu.concatenate %27, %28, %29, %30, %31, %32, %33, %34, %35 in 0 : vector<16x320xbf16>, vector<16x320xbf16>, vector<16x320xbf16>, vector<16x320xbf16>, vector<16x320xbf16>, vector<16x320xbf16>, vector<16x320xbf16>, vector<16x320xbf16>, vector<16x320xbf16> -> vector<144x320xbf16>
    %c0_10 = arith.constant 0 : index
    %c0_11 = arith.constant 0 : index
    %37 = vector.load %arg5[%c0_10, %c0_11] : memref<16x144xbf16, #tpu.memory_space<vmem>>, vector<16x144xbf16>
    %cst_12 = arith.constant dense<0.000000e+00> : vector<16x320xf32>
    %38 = tpu.matmul %37, %36, %cst_12 {dimension_numbers = #tpu.dot_dimension_numbers<[1], [0], [0], [1], [0, 0, 1, 1], [], []>} : vector<16x144xbf16>, vector<144x320xbf16>, vector<16x320xf32> -> vector<16x320xf32>
    %c0_13 = arith.constant 0 : index
    %c0_14 = arith.constant 0 : index
    %39 = vector.load %arg6[%c0_13, %c0_14] : memref<16x1xf32, #tpu.memory_space<vmem>>, vector<16x1xf32>
    %40 = vector.broadcast %39 : vector<16x1xf32> to vector<16x320xf32>
    %41 = arith.addf %38, %40 : vector<16x320xf32>
    %cst_15 = arith.constant 0.000000e+00 : f32
    %42 = vector.broadcast %cst_15 : f32 to vector<16x320xf32>
    %43 = arith.cmpf ogt, %41, %42 : vector<16x320xf32>
    %cst_16 = arith.constant 2.000000e-01 : f32
    %44 = vector.broadcast %cst_16 : f32 to vector<16x320xf32>
    %45 = arith.mulf %44, %41 : vector<16x320xf32>
    %46 = arith.select %43, %41, %45 : vector<16x320xi1>, vector<16x320xf32>
    %47 = vector.extract_strided_slice %16 {offsets = [16, 21], sizes = [16, 320], strides = [1, 1]} : vector<32x362xf32> to vector<16x320xf32>
    %48 = arith.addf %46, %47 : vector<16x320xf32>
    %c0_17 = arith.constant 0 : index
    %c0_18 = arith.constant 0 : index
    %c0_19 = arith.constant 0 : index
    %49 = vector.load %arg7[%c0_17, %c0_18, %c0_19] : memref<1x16x320xf32, #tpu.memory_space<vmem>>, vector<1x16x320xf32>
    %50 = vector.shape_cast %49 : vector<1x16x320xf32> to vector<16x320xf32>
    %51 = vector.shape_cast %48 : vector<16x320xf32> to vector<1x16x320xf32>
    tpu.vector_store %arg7[%c0_17, %c0_18, %c0_19], %51 {strides = array<i32>} : memref<1x16x320xf32, #tpu.memory_space<vmem>>, vector<1x16x320xf32>,
    return
  }
  func.func @transform_0(%arg0: i32) -> (i32, i32, i32) {
    %c0_i32 = arith.constant 0 : i32
    %c0_i32_0 = arith.constant 0 : i32
    %c0_i32_1 = arith.constant 0 : i32
    return %arg0, %c0_i32, %c0_i32_0 : i32, i32, i32
  }
  func.func @transform_1(%arg0: i32) -> (i32, i32) {
    %c0_i32 = arith.constant 0 : i32
    %c0_i32_0 = arith.constant 0 : i32
    %c0_i32_1 = arith.constant 0 : i32
    return %c0_i32, %c0_i32_0 : i32, i32
  }
  func.func @transform_2(%arg0: i32) -> (i32, i32) {
    %c0_i32 = arith.constant 0 : i32
    %c0_i32_0 = arith.constant 0 : i32
    %c0_i32_1 = arith.constant 0 : i32
    return %c0_i32, %c0_i32_0 : i32, i32
  }
  func.func @transform_3(%arg0: i32) -> (i32, i32) {
    %c0_i32 = arith.constant 0 : i32
    %c0_i32_0 = arith.constant 0 : i32
    %c0_i32_1 = arith.constant 0 : i32
    return %c0_i32, %c0_i32_0 : i32, i32
  }
  func.func @transform_4(%arg0: i32) -> (i32, i32) {
    %c0_i32 = arith.constant 0 : i32
    %c0_i32_0 = arith.constant 0 : i32
    %c0_i32_1 = arith.constant 0 : i32
    return %c0_i32, %c0_i32_0 : i32, i32
  }
  func.func @transform_5(%arg0: i32) -> (i32, i32) {
    %c0_i32 = arith.constant 0 : i32
    %c0_i32_0 = arith.constant 0 : i32
    %c0_i32_1 = arith.constant 0 : i32
    return %c0_i32, %c0_i32_0 : i32, i32
  }
  func.func @transform_6(%arg0: i32) -> (i32, i32, i32) {
    %c0_i32 = arith.constant 0 : i32
    %c0_i32_0 = arith.constant 0 : i32
    %c0_i32_1 = arith.constant 0 : i32
    return %arg0, %c0_i32, %c0_i32_0 : i32, i32, i32
  }
}

</mosaic_0001>

<llo_original>
// kernel: tpu_custom_call.1
$region0: #{tpu_custom_call.1}
  #allocation0 [shape = 'u32[]', space=smem, size = 0x4, offset = 0x4, fixed_abs, tag = 'smem constant byte address 0x4 - core index']
  #allocation1 [shape = 'u32[144,128]{1,0:T(1,128)}', space=vmem, size = 0x12000, scoped, tag = 'internal scratch']
  %s0 = inlined_call_operand.hbm [shape: bf16[2,16,404], index: 0, kind: input, shape index: {}]
  %s1 = inlined_call_operand.vmem [shape: f32[1,362], index: 1, kind: input, shape index: {}]
  %s2 = inlined_call_operand.vmem [shape: bf16[32,144], index: 2, kind: input, shape index: {}]
  %s3 = inlined_call_operand.vmem [shape: f32[32,1], index: 3, kind: input, shape index: {}]
  %s4 = inlined_call_operand.vmem [shape: bf16[16,144], index: 4, kind: input, shape index: {}]
  %s5 = inlined_call_operand.vmem [shape: f32[16,1], index: 5, kind: input, shape index: {}]
  %s6 = inlined_call_operand.hbm [shape: f32[2,16,320], index: 6, kind: output, shape index: {}]
  %s7 = sld [smem:[#allocation0]]
  $region61: #{tpu_custom_call.1} parent=0
    _
  %s9 = ssub.s32 1, %s7
  %s10 = scalar_select 0, %s9, %s7
  $region1: #{tpu_custom_call.1} parent=0
    #allocation2 [shape = 'u8[32768]{0}', space=vmem, size = 0x8000, scoped, tag = 'input window, operand 0']
    #allocation3 [shape = 's32[2]{0}', space=sflag, size = 0x8, scoped, tag = 'scoped memory for tpu_custom_call.1']
    #allocation4 [shape = 's32[2]{0}', space=sflag, size = 0x8, scoped, tag = 'scoped memory for tpu_custom_call.1']
    #allocation5 [shape = 'u8[49152]{0}', space=vmem, size = 0xc000, scoped, tag = 'output window, operand 0']
    %11 = vsyncpa [#allocation3], 0
    %s12 = scalar_lea.sflag [#allocation3], 1
    %13 = vsyncpa %s12, 0
    %14 = vsyncpa [#allocation4], 0
    %s15 = scalar_lea.sflag [#allocation4], 1
    %16 = vsyncpa %s15, 0
    loop: start=0, step=1, limit=4
    $region2: #{tpu_custom_call.1} parent=1 // loop_pre_header
      _
    $region3: #{tpu_custom_call.1} parent=1 // loop_header
      %s18 = sphi 0, %s22
      %p19 = scmp.ge.s32.totalorder %s18, 4
      %s28 = sphi 0, %s30
      %s31 = sphi 0, %s28
      %s32 = sphi 0, %s31
      %s48 = sphi 0, %s32
      %s52 = sphi 0, %s52
      %s54 = sphi 0, %s52
      %s55 = sphi 0, %s54
      %s69 = sphi 0, %s55
      %s73 = sphi 0, %s73
      %s75 = sphi 0, %s73
      %s76 = sphi 0, %s75
      %s90 = sphi 0, %s76
      %s94 = sphi 0, %s94
      %s96 = sphi 0, %s94
      %s97 = sphi 0, %s96
      %s111 = sphi 0, %s97
      %s115 = sphi 0, %s115
      %s117 = sphi 0, %s115
      %s118 = sphi 0, %s117
      %s132 = sphi 0, %s118
      %s136 = sphi 0, %s136
      %s138 = sphi 0, %s136
      %s139 = sphi 0, %s138
      %s153 = sphi 0, %s139
      %s159 = sphi 0, %s161
      %s162 = sphi 0, %s159
      %s163 = sphi 0, %s162
      %s179 = sphi 0, %s163
    $region4: #{tpu_custom_call.1} parent=1 // loop_header_branch
      %21 = sbr.rel (%p19) target = $region8
    $region5: #{tpu_custom_call.1} parent=1 // loop_body
      %s23 = ssub.s32 %s18, 1
      %s24 = ssub.s32 %s18, 2
      %s25 = sadd.s32 %s18, 1
      %s26 = ssub.s32 %s18, %s25
      %p27 = scmp.eq.s32.totalorder %s26, 0
      %s29 = sadd.s32 %s28, 1
      %s30 = scalar_select %p27, %s28, %s29
      %p33 = pneg %p27
      %p34 = scmp.eq.s32.totalorder %s18, 1
      %p35 = por %p33, %p34
      %p36 = scmp.ne.s32.totalorder %s28, %s31
      %p37 = scmp.eq.s32.totalorder %s18, 0
      %p38 = por %p36, %p37
      %p39 = scmp.ne.s32.totalorder %s28, %s31
      %p40 = scmp.eq.s32.totalorder %s23, 1
      %p41 = por %p39, %p40
      %p42 = scmp.ne.s32.totalorder %s31, %s32
      %p43 = scmp.eq.s32.totalorder %s23, 0
      %p44 = por %p42, %p43
      %p45 = scmp.ne.s32.totalorder %s31, %s32
      %p46 = scmp.eq.s32.totalorder %s24, 1
      %p47 = por %p45, %p46
      %p49 = scmp.ne.s32.totalorder %s32, %s48
      %p50 = scmp.eq.s32.totalorder %s24, 0
      %p51 = por %p49, %p50
      %s53 = sadd.s32 %s52, 1
      %p56 = scmp.eq.s32.totalorder %s18, 1
      %p57 = scmp.ne.s32.totalorder %s52, %s54
      %p58 = scmp.eq.s32.totalorder %s18, 0
      %p59 = por %p57, %p58
      %p60 = scmp.ne.s32.totalorder %s52, %s54
      %p61 = scmp.eq.s32.totalorder %s23, 1
      %p62 = por %p60, %p61
      %p63 = scmp.ne.s32.totalorder %s54, %s55
      %p64 = scmp.eq.s32.totalorder %s23, 0
      %p65 = por %p63, %p64
      %p66 = scmp.ne.s32.totalorder %s54, %s55
      %p67 = scmp.eq.s32.totalorder %s24, 1
      %p68 = por %p66, %p67
      %p70 = scmp.ne.s32.totalorder %s55, %s69
      %p71 = scmp.eq.s32.totalorder %s24, 0
      %p72 = por %p70, %p71
      %s74 = sadd.s32 %s73, 1
      %p77 = scmp.eq.s32.totalorder %s18, 1
      %p78 = scmp.ne.s32.totalorder %s73, %s75
      %p79 = scmp.eq.s32.totalorder %s18, 0
      %p80 = por %p78, %p79
      %p81 = scmp.ne.s32.totalorder %s73, %s75
      %p82 = scmp.eq.s32.totalorder %s23, 1
      %p83 = por %p81, %p82
      %p84 = scmp.ne.s32.totalorder %s75, %s76
      %p85 = scmp.eq.s32.totalorder %s23, 0
      %p86 = por %p84, %p85
      %p87 = scmp.ne.s32.totalorder %s75, %s76
      %p88 = scmp.eq.s32.totalorder %s24, 1
      %p89 = por %p87, %p88
      %p91 = scmp.ne.s32.totalorder %s76, %s90
      %p92 = scmp.eq.s32.totalorder %s24, 0
      %p93 = por %p91, %p92
      %s95 = sadd.s32 %s94, 1
      %p98 = scmp.eq.s32.totalorder %s18, 1
      %p99 = scmp.ne.s32.totalorder %s94, %s96
      %p100 = scmp.eq.s32.totalorder %s18, 0
      %p101 = por %p99, %p100
      %p102 = scmp.ne.s32.totalorder %s94, %s96
      %p103 = scmp.eq.s32.totalorder %s23, 1
      %p104 = por %p102, %p103
      %p105 = scmp.ne.s32.totalorder %s96, %s97
      %p106 = scmp.eq.s32.totalorder %s23, 0
      %p107 = por %p105, %p106
      %p108 = scmp.ne.s32.totalorder %s96, %s97
      %p109 = scmp.eq.s32.totalorder %s24, 1
      %p110 = por %p108, %p109
      %p112 = scmp.ne.s32.totalorder %s97, %s111
      %p113 = scmp.eq.s32.totalorder %s24, 0
      %p114 = por %p112, %p113
      %s116 = sadd.s32 %s115, 1
      %p119 = scmp.eq.s32.totalorder %s18, 1
      %p120 = scmp.ne.s32.totalorder %s115, %s117
      %p121 = scmp.eq.s32.totalorder %s18, 0
      %p122 = por %p120, %p121
      %p123 = scmp.ne.s32.totalorder %s115, %s117
      %p124 = scmp.eq.s32.totalorder %s23, 1
      %p125 = por %p123, %p124
      %p126 = scmp.ne.s32.totalorder %s117, %s118
      %p127 = scmp.eq.s32.totalorder %s23, 0
      %p128 = por %p126, %p127
      %p129 = scmp.ne.s32.totalorder %s117, %s118
      %p130 = scmp.eq.s32.totalorder %s24, 1
      %p131 = por %p129, %p130
      %p133 = scmp.ne.s32.totalorder %s118, %s132
      %p134 = scmp.eq.s32.totalorder %s24, 0
      %p135 = por %p133, %p134
      %s137 = sadd.s32 %s136, 1
      %p140 = scmp.eq.s32.totalorder %s18, 1
      %p141 = scmp.ne.s32.totalorder %s136, %s138
      %p142 = scmp.eq.s32.totalorder %s18, 0
      %p143 = por %p141, %p142
      %p144 = scmp.ne.s32.totalorder %s136, %s138
      %p145 = scmp.eq.s32.totalorder %s23, 1
      %p146 = por %p144, %p145
      %p147 = scmp.ne.s32.totalorder %s138, %s139
      %p148 = scmp.eq.s32.totalorder %s23, 0
      %p149 = por %p147, %p148
      %p150 = scmp.ne.s32.totalorder %s138, %s139
      %p151 = scmp.eq.s32.totalorder %s24, 1
      %p152 = por %p150, %p151
      %p154 = scmp.ne.s32.totalorder %s139, %s153
      %p155 = scmp.eq.s32.totalorder %s24, 0
      %p156 = por %p154, %p155
      %s157 = ssub.s32 %s18, %s25
      %p158 = scmp.eq.s32.totalorder %s157, 0
      %s160 = sadd.s32 %s159, 1
      %s161 = scalar_select %p158, %s159, %s160
      %p164 = pneg %p158
      %p165 = scmp.eq.s32.totalorder %s18, 1
      %p166 = por %p164, %p165
      %p167 = scmp.ne.s32.totalorder %s159, %s162
      %p168 = scmp.eq.s32.totalorder %s18, 0
      %p169 = por %p167, %p168
      %p170 = scmp.ne.s32.totalorder %s159, %s162
      %p171 = scmp.eq.s32.totalorder %s23, 1
      %p172 = por %p170, %p171
      %p173 = scmp.ne.s32.totalorder %s162, %s163
      %p174 = scmp.eq.s32.totalorder %s23, 0
      %p175 = por %p173, %p174
      %p176 = scmp.ne.s32.totalorder %s162, %s163
      %p177 = scmp.eq.s32.totalorder %s24, 1
      %p178 = por %p176, %p177
      %p180 = scmp.ne.s32.totalorder %s163, %s179
      %p181 = scmp.eq.s32.totalorder %s24, 0
      %p182 = por %p180, %p181
      %p183 = scmp.le.s32.totalorder 1, %s18
      %p184 = scmp.lt.s32.totalorder %s18, 3
      %p185 = pnand %p183, %p184
      %p186 = pneg %p185
      // Predicated region
      $region9: #{tpu_custom_call.1} parent=5 // pred_check
        _
      $region10: #{tpu_custom_call.1} parent=5 // pred_check_branch
        %188 = sbr.rel (%p185) target = $region12
      $region11: #{tpu_custom_call.1} parent=5 // pred_region
        %s189 = ssub.s32 %s18, 1
        // Predicated region
        $region13: #{tpu_custom_call.1} parent=11 // pred_check
          %p190 = pneg %p65
        $region14: #{tpu_custom_call.1} parent=11 // pred_check_branch
          %192 = sbr.rel (%p190) target = $region16
        $region15: #{tpu_custom_call.1} parent=11 // pred_region
          _
        $region16: #{tpu_custom_call.1} parent=11 // pred_fallthru
          _
        // Predicated region
        $region17: #{tpu_custom_call.1} parent=11 // pred_check
          %p193 = pneg %p86
        $region18: #{tpu_custom_call.1} parent=11 // pred_check_branch
          %195 = sbr.rel (%p193) target = $region20
        $region19: #{tpu_custom_call.1} parent=11 // pred_region
          _
        $region20: #{tpu_custom_call.1} parent=11 // pred_fallthru
          _
        // Predicated region
        $region21: #{tpu_custom_call.1} parent=11 // pred_check
          %p196 = pneg %p107
        $region22: #{tpu_custom_call.1} parent=11 // pred_check_branch
          %198 = sbr.rel (%p196) target = $region24
        $region23: #{tpu_custom_call.1} parent=11 // pred_region
          _
        $region24: #{tpu_custom_call.1} parent=11 // pred_fallthru
          _
        // Predicated region
        $region25: #{tpu_custom_call.1} parent=11 // pred_check
          %p199 = pneg %p128
        $region26: #{tpu_custom_call.1} parent=11 // pred_check_branch
          %201 = sbr.rel (%p199) target = $region28
        $region27: #{tpu_custom_call.1} parent=11 // pred_region
          _
        $region28: #{tpu_custom_call.1} parent=11 // pred_fallthru
          _
        // Predicated region
        $region29: #{tpu_custom_call.1} parent=11 // pred_check
          %p202 = pneg %p149
        $region30: #{tpu_custom_call.1} parent=11 // pred_check_branch
          %204 = sbr.rel (%p202) target = $region32
        $region31: #{tpu_custom_call.1} parent=11 // pred_region
          _
        $region32: #{tpu_custom_call.1} parent=11 // pred_fallthru
          _
      $region12: #{tpu_custom_call.1} parent=5 // pred_fallthru
        _
      %p205 = scmp.lt.s32.totalorder %s18, 2
      // Predicated region
      $region33: #{tpu_custom_call.1} parent=5 // pred_check
        %p206 = pneg %p205
      $region34: #{tpu_custom_call.1} parent=5 // pred_check_branch
        %208 = sbr.rel (%p206) target = $region36
      $region35: #{tpu_custom_call.1} parent=5 // pred_region
        // Predicated region
        $region37: #{tpu_custom_call.1} parent=35 // pred_check
          %p209 = pneg %p38
        $region38: #{tpu_custom_call.1} parent=35 // pred_check_branch
          %211 = sbr.rel (%p209) target = $region40
        $region39: #{tpu_custom_call.1} parent=35 // pred_region
          %s212 = sand.u32 %s28, 1
          %s213 = scalar_lea.sflag [#allocation3], %s212
          %s214 = sand.u32 %s28, 1
          %s215 = smul.addr %s214, 32
          %s216 = scalar_lea.vmem [#allocation2], %s215
          %s218 = ssub.s32 512, 512
          %219 = vsyncadd %s213, %s218
          %s220 = smul.addr %s18, 8
          %s221 = smul.addr %s220, 64
          %s222 = scalar_lea.hbm %s0, %s221
          %s223 = sshll.u32 %s216, 4
          %s224 = int_to_ptr.vmem [resolvable:$true] %s223
          %229 = dma.hbm_to_vmem [thread:$0]  %s222, 512, %s224, %s213, 256, 256, 16
        $region40: #{tpu_custom_call.1} parent=35 // pred_fallthru
          _
      $region36: #{tpu_custom_call.1} parent=5 // pred_fallthru
        _
      %p230 = scmp.le.s32.totalorder 1, %s18
      %p231 = scmp.lt.s32.totalorder %s18, 3
      %p232 = pnand %p230, %p231
      %p233 = pneg %p232
      // Predicated region
      $region41: #{tpu_custom_call.1} parent=5 // pred_check
        _
      $region42: #{tpu_custom_call.1} parent=5 // pred_check_branch
        %235 = sbr.rel (%p232) target = $region44
      $region43: #{tpu_custom_call.1} parent=5 // pred_region
        %s236 = ssub.s32 %s18, 1
        %s237 = sand.u32 %s31, 1
        %s238 = scalar_lea.sflag [#allocation3], %s237
        %s239 = sand.u32 %s31, 1
        %s240 = smul.addr %s239, 32
        %s241 = scalar_lea.vmem [#allocation2], %s240
        // Predicated region
        $region45: #{tpu_custom_call.1} parent=43 // pred_check
          %p242 = pneg %p44
        $region46: #{tpu_custom_call.1} parent=43 // pred_check_branch
          %244 = sbr.rel (%p242) target = $region48
        $region47: #{tpu_custom_call.1} parent=43 // pred_region
          %245 = dma.done %s238, 512
        $region48: #{tpu_custom_call.1} parent=43 // pred_fallthru
          _
        %s246 = sand.u32 %s31, 1
        %s247 = scalar_lea.sflag [#allocation3], %s246
        %s248 = sand.u32 %s31, 1
        %s249 = smul.addr %s248, 32
        %s250 = scalar_lea.vmem [#allocation2], %s249
        %p251 = pneg %p44
        %p252 = pneg %p41
        %p253 = pneg %p65
        %p254 = pneg %p62
        %p255 = pneg %p86
        %p256 = pneg %p83
        %p257 = pneg %p107
        %p258 = pneg %p104
        %p259 = pneg %p128
        %p260 = pneg %p125
        %p261 = pneg %p149
        %p262 = pneg %p146
        %p263 = pneg %p175
        %p264 = pneg %p172
        %s265 = sand.u32 %s162, 1
        %s266 = scalar_lea.sflag [#allocation4], %s265
        %s267 = sand.u32 %s162, 1
        %s268 = smul.addr %s267, 48
        %s269 = scalar_lea.vmem [#allocation5], %s268
        %v271 = vld [vmem:[%s241] sm:$0xff]
        %v272 = vld [vmem:[%s241 + $0x8] sm:$0xff]
        %v273 = vld [vmem:[%s241 + $0x10] sm:$0xff]
        %v274 = vld [vmem:[%s241 + $0x18] sm:$0xff]
        %v279 = vunpack.c.l.b16 %v271
        %v280 = vunpack.c.h.b16 %v271
        %v281 = vunpack.c.l.b16 %v272
        %v282 = vunpack.c.l.b16 %v273
        %v283 = vunpack.c.h.b16 %v273
        %v284 = vunpack.c.l.b16 %v274
        %v285 = vpack.c.b16 %v282, %v279
        %v286 = vpack.c.b16 %v283, %v280
        %v287 = vpack.c.b16 %v284, %v281
        %291 = vrot.lane.b32.xlu0 %v285, 127
        %v292 = vpop.permute.xlu0 %291
        %293 = vrot.lane.b32.xlu0 %v286, 127
        %v294 = vpop.permute.xlu0 %293
        %295 = vrot.lane.b32.xlu0 %v287, 127
        %v296 = vpop.permute.xlu0 %295
        %vm297 = vcmask 1039360
        %v298 = vsel %vm297, %v292, %v294
        %v299 = vsel %vm297, %v294, %v296
        %303 = vrot.lane.b32.xlu0 %v285, 126
        %v304 = vpop.permute.xlu0 %303
        %305 = vrot.lane.b32.xlu0 %v286, 126
        %v306 = vpop.permute.xlu0 %305
        %307 = vrot.lane.b32.xlu0 %v287, 126
        %v308 = vpop.permute.xlu0 %307
        %vm309 = vcmask 1031168
        %v310 = vsel %vm309, %v304, %v306
        %v311 = vsel %vm309, %v306, %v308
        %315 = vrot.lane.b32.xlu0 %v285, 108
        %v316 = vpop.permute.xlu0 %315
        %317 = vrot.lane.b32.xlu0 %v286, 108
        %v318 = vpop.permute.xlu0 %317
        %319 = vrot.lane.b32.xlu0 %v287, 108
        %v320 = vpop.permute.xlu0 %319
        %vm321 = vcmask 883712
        %v322 = vsel %vm321, %v316, %v318
        %v323 = vsel %vm321, %v318, %v320
        %327 = vrot.lane.b32.xlu0 %v285, 107
        %v328 = vpop.permute.xlu0 %327
        %329 = vrot.lane.b32.xlu0 %v286, 107
        %v330 = vpop.permute.xlu0 %329
        %331 = vrot.lane.b32.xlu0 %v287, 107
        %v332 = vpop.permute.xlu0 %331
        %vm333 = vcmask 875520
        %v334 = vsel %vm333, %v328, %v330
        %v335 = vsel %vm333, %v330, %v332
        %339 = vrot.lane.b32.xlu0 %v285, 106
        %v340 = vpop.permute.xlu0 %339
        %341 = vrot.lane.b32.xlu0 %v286, 106
        %v342 = vpop.permute.xlu0 %341
        %343 = vrot.lane.b32.xlu0 %v287, 106
        %v344 = vpop.permute.xlu0 %343
        %vm345 = vcmask 867328
        %v346 = vsel %vm345, %v340, %v342
        %v347 = vsel %vm345, %v342, %v344
        %v351 = vunpack.c.h.b16 %v272
        %v352 = vunpack.c.h.b16 %v274
        %v353 = vpack.c.b16 %v352, %v351
        %354 = vrot.lane.b32.xlu0 %v285, 88
        %v355 = vpop.permute.xlu0 %354
        %356 = vrot.lane.b32.xlu0 %v286, 88
        %v357 = vpop.permute.xlu0 %356
        %358 = vrot.lane.b32.xlu0 %v287, 88
        %v359 = vpop.permute.xlu0 %358
        %360 = vrot.lane.b32.xlu0 %v353, 88
        %v361 = vpop.permute.xlu0 %360
        %vm362 = vcmask 719872
        %v363 = vsel %vm362, %v355, %v357
        %v364 = vsel %vm362, %v357, %v359
        %v365 = vsel %vm362, %v359, %v361
        %369 = vrot.lane.b32.xlu0 %v285, 87
        %v370 = vpop.permute.xlu0 %369
        %371 = vrot.lane.b32.xlu0 %v286, 87
        %v372 = vpop.permute.xlu0 %371
        %373 = vrot.lane.b32.xlu0 %v287, 87
        %v374 = vpop.permute.xlu0 %373
        %375 = vrot.lane.b32.xlu0 %v353, 87
        %v376 = vpop.permute.xlu0 %375
        %vm377 = vcmask 711680
        %v378 = vsel %vm377, %v370, %v372
        %v379 = vsel %vm377, %v372, %v374
        %v380 = vsel %vm377, %v374, %v376
        %384 = vrot.lane.b32.xlu0 %v285, 86
        %v385 = vpop.permute.xlu0 %384
        %386 = vrot.lane.b32.xlu0 %v286, 86
        %v387 = vpop.permute.xlu0 %386
        %388 = vrot.lane.b32.xlu0 %v287, 86
        %v389 = vpop.permute.xlu0 %388
        %390 = vrot.lane.b32.xlu0 %v353, 86
        %v391 = vpop.permute.xlu0 %390
        %vm392 = vcmask 703488
        %v393 = vsel %vm392, %v385, %v387
        %v394 = vsel %vm392, %v387, %v389
        %v395 = vsel %vm392, %v389, %v391
        %v399 = vld [vmem:[%s2] sm:$0xff]
        %v400 = vld [vmem:[%s2 + $0x8] sm:$0xff]
        %v401 = vld [vmem:[%s2 + $0x10] sm:$0xff]
        %v402 = vld [vmem:[%s2 + $0x18] sm:$0xff]
        %v403 = vld [vmem:[%s3] sm:$0xff]
        %v404 = vld [vmem:[%s3 + $0x8] sm:$0xff]
        %v405 = vld [vmem:[%s3 + $0x10] sm:$0xff]
        %v406 = vld [vmem:[%s3 + $0x18] sm:$0xff]
        %408 = vset.pattern.permute.xlu0 0
        %409 = vperm.xlu0 %408, %v403
        %v410 = vpop.permute.xlu0 %409
        %413 = vset.pattern.permute.xlu0 0
        %414 = vperm.xlu0 %413, %v404
        %v415 = vpop.permute.xlu0 %414
        %418 = vset.pattern.permute.xlu0 0
        %419 = vperm.xlu0 %418, %v405
        %v420 = vpop.permute.xlu0 %419
        %423 = vset.pattern.permute.xlu0 0
        %424 = vperm.xlu0 %423, %v406
        %v425 = vpop.permute.xlu0 %424
        %v431 = vunpack.c.l.b16 %v399
        %v432 = vunpack.c.h.b16 %v399
        %v433 = vunpack.c.l.b16 %v400
        %v434 = vunpack.c.h.b16 %v400
        %v435 = vunpack.c.l.b16 %v401
        %v436 = vunpack.c.h.b16 %v401
        %v437 = vunpack.c.l.b16 %v402
        %v438 = vunpack.c.h.b16 %v402
        %v439 = vpack.c.b16 %v433, %v431
        %v440 = vpack.c.b16 %v434, %v432
        %v441 = vpack.c.b16 %v437, %v435
        %v442 = vpack.c.b16 %v438, %v436
        %vm445 = vcmask 130048
        %v447 = vsel %vm445, %v440, 0
        %v450 = vsel %vm445, %v442, 0
        %452 = vmatprep.subr.bf16.mxu0 %v286
        %453 = vmatpush1.bf16.msra.mxu0 %v285
        %454 = vmatprep.subr.bf16.mxu0 %v299
        %455 = vmatpush1.bf16.msra.mxu0 %v298
        %456 = vmatprep.subr.bf16.mxu0 %v311
        %457 = vmatpush1.bf16.msra.mxu0 %v310
        %458 = vmatprep.subr.bf16.mxu0 %v323
        %459 = vmatpush1.bf16.msra.mxu0 %v322
        %460 = vmatprep.subr.bf16.mxu0 %v335
        %461 = vmatpush1.bf16.msra.mxu0 %v334
        %462 = vmatprep.subr.bf16.mxu0 %v347
        %463 = vmatpush1.bf16.msra.mxu0 %v346
        %464 = vmatprep.subr.bf16.mxu0 %v364
        %465 = vmatpush1.bf16.msra.mxu0 %v363
        %466 = vmatprep.subr.bf16.mxu0 %v379
        %467 = vmatpush1.bf16.msra.mxu0 %v378
        %468 = vmatprep.subr.bf16.mxu0 %v394
        %469 = vmatpush1.bf16.msra.mxu0 %v393
        %470 = vmatprep.subr.bf16.mxu0 0
        %471 = vmatpush1.bf16.msra.mxu0 0
        %472 = vmatprep.subr.bf16.mxu0 0
        %473 = vmatpush1.bf16.msra.mxu0 0
        %474 = vmatprep.subr.bf16.mxu0 0
        %475 = vmatpush1.bf16.msra.mxu0 0
        %476 = vmatprep.subr.bf16.mxu0 0
        %477 = vmatpush1.bf16.msra.mxu0 0
        %478 = vmatprep.subr.bf16.mxu0 0
        %479 = vmatpush1.bf16.msra.mxu0 0
        %480 = vmatprep.subr.bf16.mxu0 0
        %481 = vmatpush1.bf16.msra.mxu0 0
        %482 = vmatprep.subr.bf16.mxu0 0
        %483 = vmatpush1.bf16.msra.mxu0 0
        %484 = vmatprep.mubr.bf16.mxu0 %v447
        %485 = vmatmul.mubr.bf16.gmra.mrb[0].mxu0 %v439
        %v486 = vpop.f32.mrb[0].mxu0
        %v487 = vadd.f32 %v410, %v486
        %v488 = vpop.f32.mrb[0].mxu0
        %v489 = vadd.f32 %v410, %v488
        %v490 = vpop.f32.mrb[0].mxu0
        %v491 = vadd.f32 %v415, %v490
        %v492 = vpop.f32.mrb[0].mxu0
        %v493 = vadd.f32 %v415, %v492
        %494 = vmatprep.mubr.bf16.mxu0 %v450
        %495 = vmatmul.mubr.bf16.gmra.mrb[0].mxu0 %v441
        %v496 = vpop.f32.mrb[0].mxu0
        %v497 = vadd.f32 %v420, %v496
        %v498 = vpop.f32.mrb[0].mxu0
        %v499 = vadd.f32 %v420, %v498
        %v500 = vpop.f32.mrb[0].mxu0
        %v501 = vadd.f32 %v425, %v500
        %v502 = vpop.f32.mrb[0].mxu0
        %v503 = vadd.f32 %v425, %v502
        %504 = vdwg.mxu0
        %505 = vmatprep.subr.bf16.mxu0 0
        %506 = vmatpush1.bf16.msra.mxu0 %v287
        %507 = vmatprep.subr.bf16.mxu0 0
        %508 = vmatpush1.bf16.msra.mxu0 %v296
        %509 = vmatprep.subr.bf16.mxu0 0
        %510 = vmatpush1.bf16.msra.mxu0 %v308
        %511 = vmatprep.subr.bf16.mxu0 0
        %512 = vmatpush1.bf16.msra.mxu0 %v320
        %513 = vmatprep.subr.bf16.mxu0 0
        %514 = vmatpush1.bf16.msra.mxu0 %v332
        %515 = vmatprep.subr.bf16.mxu0 0
        %516 = vmatpush1.bf16.msra.mxu0 %v344
        %517 = vmatprep.subr.bf16.mxu0 0
        %518 = vmatpush1.bf16.msra.mxu0 %v365
        %519 = vmatprep.subr.bf16.mxu0 0
        %520 = vmatpush1.bf16.msra.mxu0 %v380
        %521 = vmatprep.subr.bf16.mxu0 0
        %522 = vmatpush1.bf16.msra.mxu0 %v395
        %523 = vmatprep.subr.bf16.mxu0 0
        %524 = vmatpush1.bf16.msra.mxu0 0
        %525 = vmatprep.subr.bf16.mxu0 0
        %526 = vmatpush1.bf16.msra.mxu0 0
        %527 = vmatprep.subr.bf16.mxu0 0
        %528 = vmatpush1.bf16.msra.mxu0 0
        %529 = vmatprep.subr.bf16.mxu0 0
        %530 = vmatpush1.bf16.msra.mxu0 0
        %531 = vmatprep.subr.bf16.mxu0 0
        %532 = vmatpush1.bf16.msra.mxu0 0
        %533 = vmatprep.subr.bf16.mxu0 0
        %534 = vmatpush1.bf16.msra.mxu0 0
        %535 = vmatprep.subr.bf16.mxu0 0
        %536 = vmatpush1.bf16.msra.mxu0 0
        %537 = vmatprep.mubr.bf16.mxu0 %v447
        %538 = vmatmul.mubr.bf16.gmra.mrb[0].mxu0 %v439
        %v539 = vpop.f32.mrb[0].mxu0
        %v540 = vadd.f32 %v410, %v539
        %v541 = vpop.f32.mrb[0].mxu0
        %v542 = vpop.f32.mrb[0].mxu0
        %v543 = vadd.f32 %v415, %v542
        %v544 = vpop.f32.mrb[0].mxu0
        %545 = vmatprep.mubr.bf16.mxu0 %v450
        %546 = vmatmul.mubr.bf16.gmra.mrb[0].mxu0 %v441
        %v547 = vpop.f32.mrb[0].mxu0
        %v548 = vadd.f32 %v420, %v547
        %v549 = vpop.f32.mrb[0].mxu0
        %v550 = vpop.f32.mrb[0].mxu0
        %v551 = vadd.f32 %v425, %v550
        %v552 = vpop.f32.mrb[0].mxu0
        %553 = vdwg.mxu0
        %vm554 = vcmp.gt.f32.partialorder %v487, 0.0
        %vm555 = vcmp.gt.f32.partialorder %v489, 0.0
        %vm556 = vcmp.gt.f32.partialorder %v540, 0.0
        %vm557 = vcmp.gt.f32.partialorder %v491, 0.0
        %vm558 = vcmp.gt.f32.partialorder %v493, 0.0
        %vm559 = vcmp.gt.f32.partialorder %v543, 0.0
        %v560 = vmul.f32 %v487, 0.2
        %v561 = vmul.f32 %v489, 0.2
        %v562 = vmul.f32 %v540, 0.2
        %v563 = vmul.f32 %v491, 0.2
        %v564 = vmul.f32 %v493, 0.2
        %v565 = vmul.f32 %v543, 0.2
        %v566 = vsel %vm554, %v487, %v560
        %v567 = vsel %vm555, %v489, %v561
        %v568 = vsel %vm556, %v540, %v562
        %v569 = vsel %vm557, %v491, %v563
        %v570 = vsel %vm558, %v493, %v564
        %v571 = vsel %vm559, %v543, %v565
        %v572 = vld [vmem:[%s1] sm:$0x7]
        %v574 = vlaneseq
        %v575 = vshrl.u32 %v574, 7
        %v576 = vsub.s32 0, %v575
        %v577 = vrot.slane %v572, %v576
        %v578 = vlaneseq
        %v579 = vshrl.u32 %v578, 7
        %v580 = vsub.s32 1, %v579
        %v581 = vrot.slane %v572, %v580
        %v582 = vlaneseq
        %v583 = vshrl.u32 %v582, 7
        %v584 = vsub.s32 2, %v583
        %v585 = vrot.slane %v572, %v584
        %v589 = vmul.f32 %v566, %v577
        %v590 = vmul.f32 %v567, %v581
        %v591 = vmul.f32 %v568, %v585
        %v592 = vmul.f32 %v569, %v577
        %v593 = vmul.f32 %v570, %v581
        %v594 = vmul.f32 %v571, %v585
        %v595 = vpack.c.bf16 %v592, %v589
        %v596 = vpack.c.bf16 %v593, %v590
        %v597 = vpack.c.bf16 %v594, %v591
        %601 = vrot.lane.b32.xlu0 %v595, 127
        %v602 = vpop.permute.xlu0 %601
        %603 = vrot.lane.b32.xlu0 %v596, 127
        %v604 = vpop.permute.xlu0 %603
        %605 = vrot.lane.b32.xlu0 %v597, 127
        %v606 = vpop.permute.xlu0 %605
        %v607 = vsel %vm297, %v602, %v604
        %v608 = vsel %vm297, %v604, %v606
        %612 = vrot.lane.b32.xlu0 %v595, 126
        %v613 = vpop.permute.xlu0 %612
        %614 = vrot.lane.b32.xlu0 %v596, 126
        %v615 = vpop.permute.xlu0 %614
        %616 = vrot.lane.b32.xlu0 %v597, 126
        %v617 = vpop.permute.xlu0 %616
        %v618 = vsel %vm309, %v613, %v615
        %v619 = vsel %vm309, %v615, %v617
        %623 = vrot.lane.b32.xlu0 %v595, 108
        %v624 = vpop.permute.xlu0 %623
        %625 = vrot.lane.b32.xlu0 %v596, 108
        %v626 = vpop.permute.xlu0 %625
        %627 = vrot.lane.b32.xlu0 %v597, 108
        %v628 = vpop.permute.xlu0 %627
        %v629 = vsel %vm321, %v624, %v626
        %v630 = vsel %vm321, %v626, %v628
        %634 = vrot.lane.b32.xlu0 %v595, 107
        %v635 = vpop.permute.xlu0 %634
        %636 = vrot.lane.b32.xlu0 %v596, 107
        %v637 = vpop.permute.xlu0 %636
        %638 = vrot.lane.b32.xlu0 %v597, 107
        %v639 = vpop.permute.xlu0 %638
        %v640 = vsel %vm333, %v635, %v637
        %v641 = vsel %vm333, %v637, %v639
        %645 = vrot.lane.b32.xlu0 %v595, 106
        %v646 = vpop.permute.xlu0 %645
        %647 = vrot.lane.b32.xlu0 %v596, 106
        %v648 = vpop.permute.xlu0 %647
        %649 = vrot.lane.b32.xlu0 %v597, 106
        %v650 = vpop.permute.xlu0 %649
        %v651 = vsel %vm345, %v646, %v648
        %v652 = vsel %vm345, %v648, %v650
        %656 = vrot.lane.b32.xlu0 %v595, 88
        %v657 = vpop.permute.xlu0 %656
        %658 = vrot.lane.b32.xlu0 %v596, 88
        %v659 = vpop.permute.xlu0 %658
        %660 = vrot.lane.b32.xlu0 %v597, 88
        %v661 = vpop.permute.xlu0 %660
        %v662 = vsel %vm362, %v657, %v659
        %v663 = vsel %vm362, %v659, %v661
        %667 = vrot.lane.b32.xlu0 %v595, 87
        %v668 = vpop.permute.xlu0 %667
        %669 = vrot.lane.b32.xlu0 %v596, 87
        %v670 = vpop.permute.xlu0 %669
        %671 = vrot.lane.b32.xlu0 %v597, 87
        %v672 = vpop.permute.xlu0 %671
        %v673 = vsel %vm377, %v668, %v670
        %v674 = vsel %vm377, %v670, %v672
        %678 = vrot.lane.b32.xlu0 %v595, 86
        %v679 = vpop.permute.xlu0 %678
        %680 = vrot.lane.b32.xlu0 %v596, 86
        %v681 = vpop.permute.xlu0 %680
        %682 = vrot.lane.b32.xlu0 %v597, 86
        %v683 = vpop.permute.xlu0 %682
        %v684 = vsel %vm392, %v679, %v681
        %v685 = vsel %vm392, %v681, %v683
        %v689 = vld [vmem:[%s4] sm:$0xff]
        %v690 = vld [vmem:[%s4 + $0x8] sm:$0xff]
        %v691 = vld [vmem:[%s5] sm:$0xff]
        %v692 = vld [vmem:[%s5 + $0x8] sm:$0xff]
        %694 = vset.pattern.permute.xlu0 0
        %695 = vperm.xlu0 %694, %v691
        %v696 = vpop.permute.xlu0 %695
        %699 = vset.pattern.permute.xlu0 0
        %700 = vperm.xlu0 %699, %v692
        %v701 = vpop.permute.xlu0 %700
        %v705 = vunpack.c.l.b16 %v689
        %v706 = vunpack.c.h.b16 %v689
        %v707 = vunpack.c.l.b16 %v690
        %v708 = vunpack.c.h.b16 %v690
        %v709 = vpack.c.b16 %v707, %v705
        %v710 = vpack.c.b16 %v708, %v706
        %v713 = vsel %vm445, %v710, 0
        %715 = vmatprep.subr.bf16.mxu0 %v596
        %716 = vmatpush1.bf16.msra.mxu0 %v595
        %717 = vmatprep.subr.bf16.mxu0 %v608
        %718 = vmatpush1.bf16.msra.mxu0 %v607
        %719 = vmatprep.subr.bf16.mxu0 %v619
        %720 = vmatpush1.bf16.msra.mxu0 %v618
        %721 = vmatprep.subr.bf16.mxu0 %v630
        %722 = vmatpush1.bf16.msra.mxu0 %v629
        %723 = vmatprep.subr.bf16.mxu0 %v641
        %724 = vmatpush1.bf16.msra.mxu0 %v640
        %725 = vmatprep.subr.bf16.mxu0 %v652
        %726 = vmatpush1.bf16.msra.mxu0 %v651
        %727 = vmatprep.subr.bf16.mxu0 %v663
        %728 = vmatpush1.bf16.msra.mxu0 %v662
        %729 = vmatprep.subr.bf16.mxu0 %v674
        %730 = vmatpush1.bf16.msra.mxu0 %v673
        %731 = vmatprep.subr.bf16.mxu0 %v685
        %732 = vmatpush1.bf16.msra.mxu0 %v684
        %733 = vmatprep.subr.bf16.mxu0 0
        %734 = vmatpush1.bf16.msra.mxu0 0
        %735 = vmatprep.subr.bf16.mxu0 0
        %736 = vmatpush1.bf16.msra.mxu0 0
        %737 = vmatprep.subr.bf16.mxu0 0
        %738 = vmatpush1.bf16.msra.mxu0 0
        %739 = vmatprep.subr.bf16.mxu0 0
        %740 = vmatpush1.bf16.msra.mxu0 0
        %741 = vmatprep.subr.bf16.mxu0 0
        %742 = vmatpush1.bf16.msra.mxu0 0
        %743 = vmatprep.subr.bf16.mxu0 0
        %744 = vmatpush1.bf16.msra.mxu0 0
        %745 = vmatprep.subr.bf16.mxu0 0
        %746 = vmatpush1.bf16.msra.mxu0 0
        %747 = vmatprep.mubr.bf16.mxu0 %v713
        %748 = vmatmul.mubr.bf16.gmra.mrb[0].mxu0 %v709
        %v749 = vpop.f32.mrb[0].mxu0
        %v750 = vadd.f32 %v696, %v749
        %v751 = vpop.f32.mrb[0].mxu0
        %v752 = vadd.f32 %v696, %v751
        %v753 = vpop.f32.mrb[0].mxu0
        %v754 = vadd.f32 %v701, %v753
        %v755 = vpop.f32.mrb[0].mxu0
        %v756 = vadd.f32 %v701, %v755
        %757 = vdwg.mxu0
        %758 = vmatprep.subr.bf16.mxu0 0
        %759 = vmatpush1.bf16.msra.mxu0 %v597
        %760 = vmatprep.subr.bf16.mxu0 0
        %761 = vmatpush1.bf16.msra.mxu0 %v606
        %762 = vmatprep.subr.bf16.mxu0 0
        %763 = vmatpush1.bf16.msra.mxu0 %v617
        %764 = vmatprep.subr.bf16.mxu0 0
        %765 = vmatpush1.bf16.msra.mxu0 %v628
        %766 = vmatprep.subr.bf16.mxu0 0
        %767 = vmatpush1.bf16.msra.mxu0 %v639
        %768 = vmatprep.subr.bf16.mxu0 0
        %769 = vmatpush1.bf16.msra.mxu0 %v650
        %770 = vmatprep.subr.bf16.mxu0 0
        %771 = vmatpush1.bf16.msra.mxu0 %v661
        %772 = vmatprep.subr.bf16.mxu0 0
        %773 = vmatpush1.bf16.msra.mxu0 %v672
        %774 = vmatprep.subr.bf16.mxu0 0
        %775 = vmatpush1.bf16.msra.mxu0 %v683
        %776 = vmatprep.subr.bf16.mxu0 0
        %777 = vmatpush1.bf16.msra.mxu0 0
        %778 = vmatprep.subr.bf16.mxu0 0
        %779 = vmatpush1.bf16.msra.mxu0 0
        %780 = vmatprep.subr.bf16.mxu0 0
        %781 = vmatpush1.bf16.msra.mxu0 0
        %782 = vmatprep.subr.bf16.mxu0 0
        %783 = vmatpush1.bf16.msra.mxu0 0
        %784 = vmatprep.subr.bf16.mxu0 0
        %785 = vmatpush1.bf16.msra.mxu0 0
        %786 = vmatprep.subr.bf16.mxu0 0
        %787 = vmatpush1.bf16.msra.mxu0 0
        %788 = vmatprep.subr.bf16.mxu0 0
        %789 = vmatpush1.bf16.msra.mxu0 0
        %790 = vmatprep.mubr.bf16.mxu0 %v713
        %791 = vmatmul.mubr.bf16.gmra.mrb[0].mxu0 %v709
        %v792 = vpop.f32.mrb[0].mxu0
        %v793 = vadd.f32 %v696, %v792
        %v794 = vpop.f32.mrb[0].mxu0
        %v795 = vpop.f32.mrb[0].mxu0
        %v796 = vadd.f32 %v701, %v795
        %v797 = vpop.f32.mrb[0].mxu0
        %798 = vdwg.mxu0
        %vm799 = vcmp.gt.f32.partialorder %v750, 0.0
        %vm800 = vcmp.gt.f32.partialorder %v752, 0.0
        %vm801 = vcmp.gt.f32.partialorder %v793, 0.0
        %vm802 = vcmp.gt.f32.partialorder %v754, 0.0
        %vm803 = vcmp.gt.f32.partialorder %v756, 0.0
        %vm804 = vcmp.gt.f32.partialorder %v796, 0.0
        %v805 = vmul.f32 %v750, 0.2
        %v806 = vmul.f32 %v752, 0.2
        %v807 = vmul.f32 %v793, 0.2
        %v808 = vmul.f32 %v754, 0.2
        %v809 = vmul.f32 %v756, 0.2
        %v810 = vmul.f32 %v796, 0.2
        %v811 = vsel %vm799, %v750, %v805
        %v812 = vsel %vm800, %v752, %v806
        %v813 = vsel %vm801, %v793, %v807
        %v814 = vsel %vm802, %v754, %v808
        %v815 = vsel %vm803, %v756, %v809
        %v816 = vsel %vm804, %v796, %v810
        %823 = vrot.lane.b32.xlu0 %v497, 107
        %v824 = vpop.permute.xlu0 %823
        %825 = vrot.lane.b32.xlu0 %v499, 107
        %v826 = vpop.permute.xlu0 %825
        %827 = vrot.lane.b32.xlu0 %v548, 107
        %v828 = vpop.permute.xlu0 %827
        %829 = vrot.lane.b32.xlu0 %v501, 107
        %v830 = vpop.permute.xlu0 %829
        %831 = vrot.lane.b32.xlu0 %v503, 107
        %v832 = vpop.permute.xlu0 %831
        %833 = vrot.lane.b32.xlu0 %v551, 107
        %v834 = vpop.permute.xlu0 %833
        %vm835 = vcmask 875520
        %v836 = vsel %vm835, %v824, %v826
        %v837 = vsel %vm835, %v826, %v828
        %v838 = vsel %vm835, %v830, %v832
        %v839 = vsel %vm835, %v832, %v834
        %v846 = vadd.f32 %v811, %v836
        %v847 = vadd.f32 %v812, %v837
        %v848 = vadd.f32 %v813, %v828
        %v849 = vadd.f32 %v814, %v838
        %v850 = vadd.f32 %v815, %v839
        %v851 = vadd.f32 %v816, %v834
        %852 = vst [vmem:[%s269] sm:$0xff] %v846
        %853 = vst [vmem:[%s269 + $0x8] sm:$0xff] %v847
        %vm854 = vcmask 523264
        %855 = vst.msk [vmem:[%s269 + $0x10] sm:$0xff] %vm854, %v848
        %856 = vst [vmem:[%s269 + $0x18] sm:$0xff] %v849
        %857 = vst [vmem:[%s269 + $0x20] sm:$0xff] %v850
        %858 = vst.msk [vmem:[%s269 + $0x28] sm:$0xff] %vm854, %v851
        %s859 = sand.u32 %s162, 1
        %s860 = scalar_lea.sflag [#allocation4], %s859
        %s861 = sand.u32 %s162, 1
        %s862 = smul.addr %s861, 48
        %s863 = scalar_lea.vmem [#allocation5], %s862
        // Predicated region
        $region49: #{tpu_custom_call.1} parent=43 // pred_check
          %p864 = pneg %p172
        $region50: #{tpu_custom_call.1} parent=43 // pred_check_branch
          %866 = sbr.rel (%p864) target = $region52
        $region51: #{tpu_custom_call.1} parent=43 // pred_region
          %s868 = ssub.s32 768, 768
          %869 = vsyncadd %s860, %s868
          %s870 = smul.addr %s23, 6
          %s871 = smul.addr %s870, 128
          %s872 = scalar_lea.hbm %s6, %s871
          %s873 = sshll.u32 %s863, 4
          %s874 = int_to_ptr.vmem [resolvable:$true] %s873
          %879 = dma.vmem_to_hbm [thread:$0]  %s874, 768, %s872, %s860, 384, 384, 24
        $region52: #{tpu_custom_call.1} parent=43 // pred_fallthru
          _
      $region44: #{tpu_custom_call.1} parent=5 // pred_fallthru
        _
      %p880 = scmp.le.s32.totalorder 2, %s18
      // Predicated region
      $region53: #{tpu_custom_call.1} parent=5 // pred_check
        %p881 = pneg %p880
      $region54: #{tpu_custom_call.1} parent=5 // pred_check_branch
        %883 = sbr.rel (%p881) target = $region56
      $region55: #{tpu_custom_call.1} parent=5 // pred_region
        %s884 = ssub.s32 %s18, 2
        // Predicated region
        $region57: #{tpu_custom_call.1} parent=55 // pred_check
          %p885 = pneg %p178
        $region58: #{tpu_custom_call.1} parent=55 // pred_check_branch
          %887 = sbr.rel (%p885) target = $region60
        $region59: #{tpu_custom_call.1} parent=55 // pred_region
          %s888 = sand.u32 %s163, 1
          %s889 = scalar_lea.sflag [#allocation4], %s888
          %s890 = sand.u32 %s163, 1
          %s891 = smul.addr %s890, 48
          %s892 = scalar_lea.vmem [#allocation5], %s891
          %893 = dma.done %s889, 768
        $region60: #{tpu_custom_call.1} parent=55 // pred_fallthru
          _
      $region56: #{tpu_custom_call.1} parent=5 // pred_fallthru
        _
    $region6: #{tpu_custom_call.1} parent=1 // loop_footer
      %s22 = sadd.s32 1, %s18
    $region7: #{tpu_custom_call.1} parent=1 // loop_footer_branch
      %17 = sbr.rel target = $region3
    $region8: #{tpu_custom_call.1} parent=1 // loop_exit
      _
    %894 = vsyncpa [#allocation3], 1
    %s895 = scalar_lea.sflag [#allocation3], 1
    %896 = vsyncpa %s895, 1
    %897 = vsyncpa [#allocation4], 1
    %s898 = scalar_lea.sflag [#allocation4], 1
    %899 = vsyncpa %s898, 1

</llo_original>
